<compile_context>
chip_gen: v7x
topology: tpu7x:2x2x1
jax: 0.10.0
libtpu: 0.0.40
codegen_flags: <defaults>
</compile_context>

<pallas_src>
import functools

import jax
import jax.numpy as jnp
from jax.experimental import pallas as pl
from jax.experimental.pallas import tpu as pltpu

LN_EPS = 1e-5  # nn.LayerNorm default


def _round_up(x, m):
    return ((x + m - 1) // m) * m


def _layer_norm(h, gamma, beta, inv_d):
    # mean / biased variance with a single centered tensor and a static 1/D.
    mean = jnp.sum(h, axis=-1, keepdims=True) * inv_d
    centered = h - mean
    var = jnp.sum(centered * centered, axis=-1, keepdims=True) * inv_d
    return centered * jax.lax.rsqrt(var + LN_EPS) * gamma + beta


def actor_kernel(state_ref,
                 w1_ref, b1_ref, g1_ref, be1_ref,
                 w2_ref, b2_ref, g2_ref, be2_ref,
                 wmu_ref, bmu_ref,
                 out_ref, *, inv_fc1, inv_fc2):
    x = state_ref[...]

    # fc1 -> LayerNorm -> ReLU
    h = jnp.dot(x, w1_ref[...], preferred_element_type=jnp.float32) + b1_ref[...]
    h = _layer_norm(h, g1_ref[...], be1_ref[...], inv_fc1)
    h = jnp.maximum(h, 0.0)

    # fc2 -> LayerNorm -> ReLU
    h = jnp.dot(h, w2_ref[...], preferred_element_type=jnp.float32) + b2_ref[...]
    h = _layer_norm(h, g2_ref[...], be2_ref[...], inv_fc2)
    h = jnp.maximum(h, 0.0)

    # mu -> tanh  (output slab is lane-padded to a multiple of 128)
    a = jnp.dot(h, wmu_ref[...], preferred_element_type=jnp.float32) + bmu_ref[...]
    out_ref[...] = jnp.tanh(a)


@functools.partial(jax.jit, static_argnames=("tile_b",))
def actor_forward(state, params, *, tile_b=256):
    (w1, b1, g1, be1, w2, b2, g2, be2, wmu, bmu) = params

    B, in_dim = state.shape
    fc1_dims = w1.shape[1]
    fc2_dims = w2.shape[1]
    n_actions = wmu.shape[1]

    # ---- batch tiling: TILE_B multiple of 8 (f32 sublane), grid over batch ----
    b_pad = _round_up(B, 8)
    tile_b = min(tile_b, b_pad)
    tile_b = _round_up(tile_b, 8)
    b_pad = _round_up(b_pad, tile_b)
    grid = (b_pad // tile_b,)

    state_p = state
    if b_pad != B:
        state_p = jnp.pad(state, ((0, b_pad - B), (0, 0)))

    # ---- lane-dense output: pad mu's out dim to a multiple of 128 ----
    out_pad = _round_up(n_actions, 128)
    wmu_p = jnp.pad(wmu, ((0, 0), (0, out_pad - n_actions)))
    bmu_p = jnp.pad(bmu, ((0, 0), (0, out_pad - n_actions)))

    const = lambda i: (0, 0)   # weights stay resident in VMEM across grid steps
    in_specs = [
        pl.BlockSpec((tile_b, in_dim), lambda i: (i, 0)),      # state tile
        pl.BlockSpec((in_dim, fc1_dims), const),               # w1
        pl.BlockSpec((1, fc1_dims), const),                    # b1
        pl.BlockSpec((1, fc1_dims), const),                    # g1
        pl.BlockSpec((1, fc1_dims), const),                    # be1
        pl.BlockSpec((fc1_dims, fc2_dims), const),             # w2
        pl.BlockSpec((1, fc2_dims), const),                    # b2
        pl.BlockSpec((1, fc2_dims), const),                    # g2
        pl.BlockSpec((1, fc2_dims), const),                    # be2
        pl.BlockSpec((fc2_dims, out_pad), const),              # wmu (padded)
        pl.BlockSpec((1, out_pad), const),                     # bmu (padded)
    ]
    out_specs = pl.BlockSpec((tile_b, out_pad), lambda i: (i, 0))

    flops = 2 * b_pad * (in_dim * fc1_dims + fc1_dims * fc2_dims
                         + fc2_dims * out_pad)
    bytes_accessed = 4 * (b_pad * in_dim + b_pad * out_pad
                          + in_dim * fc1_dims + fc1_dims * fc2_dims
                          + fc2_dims * out_pad
                          + 4 * fc1_dims + 4 * fc2_dims + out_pad)
    transcendentals = b_pad * (fc1_dims + fc2_dims + out_pad)  # rsqrt + tanh

    kernel = functools.partial(actor_kernel,
                               inv_fc1=1.0 / float(fc1_dims),
                               inv_fc2=1.0 / float(fc2_dims))

    out_padded = pl.pallas_call(
        kernel,
        out_shape=jax.ShapeDtypeStruct((b_pad, out_pad), jnp.float32),
        grid=grid,
        in_specs=in_specs,
        out_specs=out_specs,
        compiler_params=pltpu.CompilerParams(
            dimension_semantics=("parallel",)),
        cost_estimate=pl.CostEstimate(flops=flops,
                                      transcendentals=transcendentals,
                                      bytes_accessed=bytes_accessed),
    )(state_p, w1, b1, g1, be1, w2, b2, g2, be2, wmu_p, bmu_p)

    return out_padded[:B, :n_actions]


def init_actor_params(key, input_dim, fc1_dims, fc2_dims, n_actions):
    """Deterministic init mirroring the PyTorch __init__ (uniform ranges)."""
    k1w, k1b, k2w, k2b, k3w, k3b = jax.random.split(key, 6)

    # NOTE: the reference code uses 1/sqrt(weight.size()[0]) = 1/sqrt(out_features)
    f1 = 1.0 / jnp.sqrt(jnp.float32(fc1_dims))
    f2 = 1.0 / jnp.sqrt(jnp.float32(fc2_dims))
    f3 = 0.003

    def u(k, shape, lim):
        return jax.random.uniform(k, shape, jnp.float32, -lim, lim)

    w1 = u(k1w, (input_dim, fc1_dims), f1)
    b1 = u(k1b, (1, fc1_dims), f1)
    g1 = jnp.ones((1, fc1_dims), jnp.float32)    # LayerNorm weight
    be1 = jnp.zeros((1, fc1_dims), jnp.float32)  # LayerNorm bias

    w2 = u(k2w, (fc1_dims, fc2_dims), f2)
    b2 = u(k2b, (1, fc2_dims), f2)
    g2 = jnp.ones((1, fc2_dims), jnp.float32)
    be2 = jnp.zeros((1, fc2_dims), jnp.float32)

    wmu = u(k3w, (fc2_dims, n_actions), f3)
    bmu = u(k3b, (1, n_actions), f3)

    return (w1, b1, g1, be1, w2, b2, g2, be2, wmu, bmu)


def actor_forward_ref(state, params):
    """Pure-JAX reference for correctness checking."""
    (w1, b1, g1, be1, w2, b2, g2, be2, wmu, bmu) = params

    def ln(h, gamma, beta):
        mean = jnp.mean(h, axis=-1, keepdims=True)
        var = jnp.mean((h - mean) ** 2, axis=-1, keepdims=True)
        return (h - mean) * jax.lax.rsqrt(var + LN_EPS) * gamma + beta

    h = state @ w1 + b1
    h = jnp.maximum(ln(h, g1, be1), 0.0)
    h = h @ w2 + b2
    h = jnp.maximum(ln(h, g2, be2), 0.0)
    return jnp.tanh(h @ wmu + bmu)


if __name__ == "__main__":
    key = jax.random.PRNGKey(0)
    k_param, k_state = jax.random.split(key)

    # Small LunarLander-like sizes: input_dims=(8,), fc1=64, fc2=32, n_actions=4
    batch, input_dim, fc1_dims, fc2_dims, n_actions = 4, 8, 64, 32, 4

    params = init_actor_params(k_param, input_dim, fc1_dims, fc2_dims, n_actions)
    state = jax.random.normal(k_state, (batch, input_dim), jnp.float32)

    out = actor_forward(state, params)
    out = jax.block_until_ready(out)

    ref = actor_forward_ref(state, params)
    assert out.shape == (batch, n_actions)
    assert jnp.allclose(out, ref, atol=1e-5, rtol=1e-5)

    # Also exercise a multi-tile batch (exercises the grid + padding paths).
    big_state = jax.random.normal(jax.random.PRNGKey(1), (1000, input_dim),
                                  jnp.float32)
    big_out = jax.block_until_ready(actor_forward(big_state, params))
    big_ref = actor_forward_ref(big_state, params)
    assert big_out.shape == (1000, n_actions)
    assert jnp.allclose(big_out, big_ref, atol=1e-5, rtol=1e-5)

    print("KERNEL_OK")
</pallas_src>

<mosaic_0001>
module attributes {stable_mosaic.version = 11 : i64} {
  func.func @actor_kernel(%arg0: i32, %arg1: memref<8x8xf32, #tpu.memory_space<vmem>>, %arg2: memref<8x64xf32, #tpu.memory_space<vmem>>, %arg3: memref<1x64xf32, #tpu.memory_space<vmem>>, %arg4: memref<1x64xf32, #tpu.memory_space<vmem>>, %arg5: memref<1x64xf32, #tpu.memory_space<vmem>>, %arg6: memref<64x32xf32, #tpu.memory_space<vmem>>, %arg7: memref<1x32xf32, #tpu.memory_space<vmem>>, %arg8: memref<1x32xf32, #tpu.memory_space<vmem>>, %arg9: memref<1x32xf32, #tpu.memory_space<vmem>>, %arg10: memref<32x128xf32, #tpu.memory_space<vmem>>, %arg11: memref<1x128xf32, #tpu.memory_space<vmem>>, %arg12: memref<8x128xf32, #tpu.memory_space<vmem>>) attributes {dimension_semantics = [#tpu.dimension_semantics<parallel>], iteration_bounds = array<i64: 1>, scalar_prefetch = 0 : i64, scratch_operands = 0 : i64, tpu.core_type = #tpu.core_type<tc>, window_params = [{transform_indices = @transform_0, window_bounds = array<i64: 8, 8>}, {pipeline_mode = #tpu.pipeline_mode<synchronous>, transform_indices = @transform_1, window_bounds = array<i64: 8, 64>}, {pipeline_mode = #tpu.pipeline_mode<synchronous>, transform_indices = @transform_2, window_bounds = array<i64: 1, 64>}, {pipeline_mode = #tpu.pipeline_mode<synchronous>, transform_indices = @transform_3, window_bounds = array<i64: 1, 64>}, {pipeline_mode = #tpu.pipeline_mode<synchronous>, transform_indices = @transform_4, window_bounds = array<i64: 1, 64>}, {pipeline_mode = #tpu.pipeline_mode<synchronous>, transform_indices = @transform_5, window_bounds = array<i64: 64, 32>}, {pipeline_mode = #tpu.pipeline_mode<synchronous>, transform_indices = @transform_6, window_bounds = array<i64: 1, 32>}, {pipeline_mode = #tpu.pipeline_mode<synchronous>, transform_indices = @transform_7, window_bounds = array<i64: 1, 32>}, {pipeline_mode = #tpu.pipeline_mode<synchronous>, transform_indices = @transform_8, window_bounds = array<i64: 1, 32>}, {pipeline_mode = #tpu.pipeline_mode<synchronous>, transform_indices = @transform_9, window_bounds = array<i64: 32, 128>}, {pipeline_mode = #tpu.pipeline_mode<synchronous>, transform_indices = @transform_10, window_bounds = array<i64: 1, 128>}, {transform_indices = @transform_11, window_bounds = array<i64: 8, 128>}]} {
    %c0 = arith.constant 0 : index
    %c0_0 = arith.constant 0 : index
    %0 = vector.load %arg1[%c0, %c0_0] : memref<8x8xf32, #tpu.memory_space<vmem>>, vector<8x8xf32>
    %c0_1 = arith.constant 0 : index
    %c0_2 = arith.constant 0 : index
    %1 = vector.load %arg2[%c0_1, %c0_2] : memref<8x64xf32, #tpu.memory_space<vmem>>, vector<8x64xf32>
    %cst = arith.constant dense<0.000000e+00> : vector<8x64xf32>
    %2 = tpu.matmul %0, %1, %cst {dimension_numbers = #tpu.dot_dimension_numbers<[1], [0], [0], [1], [0, 0, 1, 1], [], []>} : vector<8x8xf32>, vector<8x64xf32>, vector<8x64xf32> -> vector<8x64xf32>
    %c0_3 = arith.constant 0 : index
    %c0_4 = arith.constant 0 : index
    %3 = vector.load %arg3[%c0_3, %c0_4] : memref<1x64xf32, #tpu.memory_space<vmem>>, vector<1x64xf32>
    %4 = vector.broadcast %3 : vector<1x64xf32> to vector<8x64xf32>
    %5 = arith.addf %2, %4 : vector<8x64xf32>
    %c0_5 = arith.constant 0 : index
    %c0_6 = arith.constant 0 : index
    %6 = vector.load %arg4[%c0_5, %c0_6] : memref<1x64xf32, #tpu.memory_space<vmem>>, vector<1x64xf32>
    %c0_7 = arith.constant 0 : index
    %c0_8 = arith.constant 0 : index
    %7 = vector.load %arg5[%c0_7, %c0_8] : memref<1x64xf32, #tpu.memory_space<vmem>>, vector<1x64xf32>
    %cst_9 = arith.constant dense<0.000000e+00> : vector<8xf32>
    %8 = vector.multi_reduction <add>, %5, %cst_9 [1] : vector<8x64xf32> to vector<8xf32>
    %9 = vector.shape_cast %8 : vector<8xf32> to vector<8x1xf32>
    %cst_10 = arith.constant 1.562500e-02 : f32
    %10 = vector.broadcast %cst_10 : f32 to vector<8x1xf32>
    %11 = arith.mulf %9, %10 : vector<8x1xf32>
    %12 = vector.broadcast %11 : vector<8x1xf32> to vector<8x64xf32>
    %13 = arith.subf %5, %12 : vector<8x64xf32>
    %14 = arith.mulf %13, %13 : vector<8x64xf32>
    %cst_11 = arith.constant dense<0.000000e+00> : vector<8xf32>
    %15 = vector.multi_reduction <add>, %14, %cst_11 [1] : vector<8x64xf32> to vector<8xf32>
    %16 = vector.shape_cast %15 : vector<8xf32> to vector<8x1xf32>
    %cst_12 = arith.constant 1.562500e-02 : f32
    %17 = vector.broadcast %cst_12 : f32 to vector<8x1xf32>
    %18 = arith.mulf %16, %17 : vector<8x1xf32>
    %cst_13 = arith.constant 9.99999974E-6 : f32
    %19 = vector.broadcast %cst_13 : f32 to vector<8x1xf32>
    %20 = arith.addf %18, %19 : vector<8x1xf32>
    %21 = math.rsqrt %20 : vector<8x1xf32>
    %22 = vector.broadcast %21 : vector<8x1xf32> to vector<8x64xf32>
    %23 = arith.mulf %13, %22 : vector<8x64xf32>
    %24 = vector.broadcast %6 : vector<1x64xf32> to vector<8x64xf32>
    %25 = arith.mulf %23, %24 : vector<8x64xf32>
    %26 = vector.broadcast %7 : vector<1x64xf32> to vector<8x64xf32>
    %27 = arith.addf %25, %26 : vector<8x64xf32>
    %cst_14 = arith.constant 0.000000e+00 : f32
    %28 = vector.broadcast %cst_14 : f32 to vector<8x64xf32>
    %29 = arith.maximumf %27, %28 : vector<8x64xf32>
    %c0_15 = arith.constant 0 : index
    %c0_16 = arith.constant 0 : index
    %30 = vector.load %arg6[%c0_15, %c0_16] : memref<64x32xf32, #tpu.memory_space<vmem>>, vector<64x32xf32>
    %cst_17 = arith.constant dense<0.000000e+00> : vector<8x32xf32>
    %31 = tpu.matmul %29, %30, %cst_17 {dimension_numbers = #tpu.dot_dimension_numbers<[1], [0], [0], [1], [0, 0, 1, 1], [], []>} : vector<8x64xf32>, vector<64x32xf32>, vector<8x32xf32> -> vector<8x32xf32>
    %c0_18 = arith.constant 0 : index
    %c0_19 = arith.constant 0 : index
    %32 = vector.load %arg7[%c0_18, %c0_19] : memref<1x32xf32, #tpu.memory_space<vmem>>, vector<1x32xf32>
    %33 = vector.broadcast %32 : vector<1x32xf32> to vector<8x32xf32>
    %34 = arith.addf %31, %33 : vector<8x32xf32>
    %c0_20 = arith.constant 0 : index
    %c0_21 = arith.constant 0 : index
    %35 = vector.load %arg8[%c0_20, %c0_21] : memref<1x32xf32, #tpu.memory_space<vmem>>, vector<1x32xf32>
    %c0_22 = arith.constant 0 : index
    %c0_23 = arith.constant 0 : index
    %36 = vector.load %arg9[%c0_22, %c0_23] : memref<1x32xf32, #tpu.memory_space<vmem>>, vector<1x32xf32>
    %cst_24 = arith.constant dense<0.000000e+00> : vector<8xf32>
    %37 = vector.multi_reduction <add>, %34, %cst_24 [1] : vector<8x32xf32> to vector<8xf32>
    %38 = vector.shape_cast %37 : vector<8xf32> to vector<8x1xf32>
    %cst_25 = arith.constant 3.125000e-02 : f32
    %39 = vector.broadcast %cst_25 : f32 to vector<8x1xf32>
    %40 = arith.mulf %38, %39 : vector<8x1xf32>
    %41 = vector.broadcast %40 : vector<8x1xf32> to vector<8x32xf32>
    %42 = arith.subf %34, %41 : vector<8x32xf32>
    %43 = arith.mulf %42, %42 : vector<8x32xf32>
    %cst_26 = arith.constant dense<0.000000e+00> : vector<8xf32>
    %44 = vector.multi_reduction <add>, %43, %cst_26 [1] : vector<8x32xf32> to vector<8xf32>
    %45 = vector.shape_cast %44 : vector<8xf32> to vector<8x1xf32>
    %cst_27 = arith.constant 3.125000e-02 : f32
    %46 = vector.broadcast %cst_27 : f32 to vector<8x1xf32>
    %47 = arith.mulf %45, %46 : vector<8x1xf32>
    %cst_28 = arith.constant 9.99999974E-6 : f32
    %48 = vector.broadcast %cst_28 : f32 to vector<8x1xf32>
    %49 = arith.addf %47, %48 : vector<8x1xf32>
    %50 = math.rsqrt %49 : vector<8x1xf32>
    %51 = vector.broadcast %50 : vector<8x1xf32> to vector<8x32xf32>
    %52 = arith.mulf %42, %51 : vector<8x32xf32>
    %53 = vector.broadcast %35 : vector<1x32xf32> to vector<8x32xf32>
    %54 = arith.mulf %52, %53 : vector<8x32xf32>
    %55 = vector.broadcast %36 : vector<1x32xf32> to vector<8x32xf32>
    %56 = arith.addf %54, %55 : vector<8x32xf32>
    %cst_29 = arith.constant 0.000000e+00 : f32
    %57 = vector.broadcast %cst_29 : f32 to vector<8x32xf32>
    %58 = arith.maximumf %56, %57 : vector<8x32xf32>
    %c0_30 = arith.constant 0 : index
    %c0_31 = arith.constant 0 : index
    %59 = vector.load %arg10[%c0_30, %c0_31] : memref<32x128xf32, #tpu.memory_space<vmem>>, vector<32x128xf32>
    %cst_32 = arith.constant dense<0.000000e+00> : vector<8x128xf32>
    %60 = tpu.matmul %58, %59, %cst_32 {dimension_numbers = #tpu.dot_dimension_numbers<[1], [0], [0], [1], [0, 0, 1, 1], [], []>} : vector<8x32xf32>, vector<32x128xf32>, vector<8x128xf32> -> vector<8x128xf32>
    %c0_33 = arith.constant 0 : index
    %c0_34 = arith.constant 0 : index
    %61 = vector.load %arg11[%c0_33, %c0_34] : memref<1x128xf32, #tpu.memory_space<vmem>>, vector<1x128xf32>
    %62 = vector.broadcast %61 : vector<1x128xf32> to vector<8x128xf32>
    %63 = arith.addf %60, %62 : vector<8x128xf32>
    %64 = math.tanh %63 : vector<8x128xf32>
    %c0_35 = arith.constant 0 : index
    %c0_36 = arith.constant 0 : index
    %65 = vector.load %arg12[%c0_35, %c0_36] : memref<8x128xf32, #tpu.memory_space<vmem>>, vector<8x128xf32>
    tpu.vector_store %arg12[%c0_35, %c0_36], %64 {strides = array<i32>} : memref<8x128xf32, #tpu.memory_space<vmem>>, vector<8x128xf32>,
    return
  }
  func.func @transform_0(%arg0: i32) -> (i32, i32) {
    %c0_i32 = arith.constant 0 : i32
    %c0_i32_0 = arith.constant 0 : i32
    return %arg0, %c0_i32 : i32, i32
  }
  func.func @transform_1(%arg0: i32) -> (i32, i32) {
    %c0_i32 = arith.constant 0 : i32
    %c0_i32_0 = arith.constant 0 : i32
    %c0_i32_1 = arith.constant 0 : i32
    return %c0_i32, %c0_i32_0 : i32, i32
  }
  func.func @transform_2(%arg0: i32) -> (i32, i32) {
    %c0_i32 = arith.constant 0 : i32
    %c0_i32_0 = arith.constant 0 : i32
    %c0_i32_1 = arith.constant 0 : i32
    return %c0_i32, %c0_i32_0 : i32, i32
  }
  func.func @transform_3(%arg0: i32) -> (i32, i32) {
    %c0_i32 = arith.constant 0 : i32
    %c0_i32_0 = arith.constant 0 : i32
    %c0_i32_1 = arith.constant 0 : i32
    return %c0_i32, %c0_i32_0 : i32, i32
  }
  func.func @transform_4(%arg0: i32) -> (i32, i32) {
    %c0_i32 = arith.constant 0 : i32
    %c0_i32_0 = arith.constant 0 : i32
    %c0_i32_1 = arith.constant 0 : i32
    return %c0_i32, %c0_i32_0 : i32, i32
  }
  func.func @transform_5(%arg0: i32) -> (i32, i32) {
    %c0_i32 = arith.constant 0 : i32
    %c0_i32_0 = arith.constant 0 : i32
    %c0_i32_1 = arith.constant 0 : i32
    return %c0_i32, %c0_i32_0 : i32, i32
  }
  func.func @transform_6(%arg0: i32) -> (i32, i32) {
    %c0_i32 = arith.constant 0 : i32
    %c0_i32_0 = arith.constant 0 : i32
    %c0_i32_1 = arith.constant 0 : i32
    return %c0_i32, %c0_i32_0 : i32, i32
  }
  func.func @transform_7(%arg0: i32) -> (i32, i32) {
    %c0_i32 = arith.constant 0 : i32
    %c0_i32_0 = arith.constant 0 : i32
    %c0_i32_1 = arith.constant 0 : i32
    return %c0_i32, %c0_i32_0 : i32, i32
  }
  func.func @transform_8(%arg0: i32) -> (i32, i32) {
    %c0_i32 = arith.constant 0 : i32
    %c0_i32_0 = arith.constant 0 : i32
    %c0_i32_1 = arith.constant 0 : i32
    return %c0_i32, %c0_i32_0 : i32, i32
  }
  func.func @transform_9(%arg0: i32) -> (i32, i32) {
    %c0_i32 = arith.constant 0 : i32
    %c0_i32_0 = arith.constant 0 : i32
    %c0_i32_1 = arith.constant 0 : i32
    return %c0_i32, %c0_i32_0 : i32, i32
  }
  func.func @transform_10(%arg0: i32) -> (i32, i32) {
    %c0_i32 = arith.constant 0 : i32
    %c0_i32_0 = arith.constant 0 : i32
    %c0_i32_1 = arith.constant 0 : i32
    return %c0_i32, %c0_i32_0 : i32, i32
  }
  func.func @transform_11(%arg0: i32) -> (i32, i32) {
    %c0_i32 = arith.constant 0 : i32
    %c0_i32_0 = arith.constant 0 : i32
    return %arg0, %c0_i32 : i32, i32
  }
}

</mosaic_0001>

<llo_original>
// kernel: actor_forward.1
$region0: #{actor_forward.1}
  #allocation0 [shape = 'u32[]', space=smem, size = 0x4, offset = 0x4, fixed_abs, tag = 'smem constant byte address 0x4 - core index']
  #allocation1 [shape = 'u32[144,128]{1,0:T(1,128)}', space=vmem, size = 0x12000, scoped, tag = 'internal scratch']
  %s0 = inlined_call_operand.vmem [shape: f32[8,8], index: 0, kind: input, shape index: {}]
  %s1 = inlined_call_operand.vmem [shape: f32[8,64], index: 1, kind: input, shape index: {}]
  %s2 = inlined_call_operand.vmem [shape: f32[1,64], index: 2, kind: input, shape index: {}]
  %s3 = inlined_call_operand.vmem [shape: f32[1,64], index: 3, kind: input, shape index: {}]
  %s4 = inlined_call_operand.vmem [shape: f32[1,64], index: 4, kind: input, shape index: {}]
  %s5 = inlined_call_operand.vmem [shape: f32[64,32], index: 5, kind: input, shape index: {}]
  %s6 = inlined_call_operand.vmem [shape: f32[1,32], index: 6, kind: input, shape index: {}]
  %s7 = inlined_call_operand.vmem [shape: f32[1,32], index: 7, kind: input, shape index: {}]
  %s8 = inlined_call_operand.vmem [shape: f32[1,32], index: 8, kind: input, shape index: {}]
  %s9 = inlined_call_operand.vmem [shape: f32[32,128], index: 9, kind: input, shape index: {}]
  %s10 = inlined_call_operand.vmem [shape: f32[1,128], index: 10, kind: input, shape index: {}]
  %s11 = inlined_call_operand.vmem [shape: f32[8,128], index: 11, kind: output, shape index: {}]
  %s12 = sld [smem:[#allocation0]]
  $region54: #{actor_forward.1} parent=0
    _
  %s14 = ssub.s32 1, %s12
  %s15 = scalar_select 0, %s14, %s12
  // Predicated region
  $region2: #{actor_forward.1} parent=0 // pred_check
    _
  $region3: #{actor_forward.1} parent=0 // pred_check_branch
    %17 = sbr.rel (0) target = $region5
  $region4: #{actor_forward.1} parent=0 // pred_region
    _
  $region5: #{actor_forward.1} parent=0 // pred_fallthru
    _
  // Predicated region
  $region6: #{actor_forward.1} parent=0 // pred_check
    _
  $region7: #{actor_forward.1} parent=0 // pred_check_branch
    %19 = sbr.rel (0) target = $region9
  $region8: #{actor_forward.1} parent=0 // pred_region
    _
  $region9: #{actor_forward.1} parent=0 // pred_fallthru
    _
  // Predicated region
  $region10: #{actor_forward.1} parent=0 // pred_check
    _
  $region11: #{actor_forward.1} parent=0 // pred_check_branch
    %21 = sbr.rel (0) target = $region13
  $region12: #{actor_forward.1} parent=0 // pred_region
    _
  $region13: #{actor_forward.1} parent=0 // pred_fallthru
    _
  // Predicated region
  $region14: #{actor_forward.1} parent=0 // pred_check
    _
  $region15: #{actor_forward.1} parent=0 // pred_check_branch
    %23 = sbr.rel (0) target = $region17
  $region16: #{actor_forward.1} parent=0 // pred_region
    _
  $region17: #{actor_forward.1} parent=0 // pred_fallthru
    _
  // Predicated region
  $region18: #{actor_forward.1} parent=0 // pred_check
    _
  $region19: #{actor_forward.1} parent=0 // pred_check_branch
    %25 = sbr.rel (0) target = $region21
  $region20: #{actor_forward.1} parent=0 // pred_region
    _
  $region21: #{actor_forward.1} parent=0 // pred_fallthru
    _
  // Predicated region
  $region22: #{actor_forward.1} parent=0 // pred_check
    _
  $region23: #{actor_forward.1} parent=0 // pred_check_branch
    %27 = sbr.rel (0) target = $region25
  $region24: #{actor_forward.1} parent=0 // pred_region
    _
  $region25: #{actor_forward.1} parent=0 // pred_fallthru
    _
  // Predicated region
  $region26: #{actor_forward.1} parent=0 // pred_check
    _
  $region27: #{actor_forward.1} parent=0 // pred_check_branch
    %29 = sbr.rel (0) target = $region29
  $region28: #{actor_forward.1} parent=0 // pred_region
    _
  $region29: #{actor_forward.1} parent=0 // pred_fallthru
    _
  // Predicated region
  $region30: #{actor_forward.1} parent=0 // pred_check
    _
  $region31: #{actor_forward.1} parent=0 // pred_check_branch
    %31 = sbr.rel (0) target = $region33
  $region32: #{actor_forward.1} parent=0 // pred_region
    _
  $region33: #{actor_forward.1} parent=0 // pred_fallthru
    _
  // Predicated region
  $region34: #{actor_forward.1} parent=0 // pred_check
    _
  $region35: #{actor_forward.1} parent=0 // pred_check_branch
    %33 = sbr.rel (0) target = $region37
  $region36: #{actor_forward.1} parent=0 // pred_region
    _
  $region37: #{actor_forward.1} parent=0 // pred_fallthru
    _
  // Predicated region
  $region38: #{actor_forward.1} parent=0 // pred_check
    _
  $region39: #{actor_forward.1} parent=0 // pred_check_branch
    %35 = sbr.rel (0) target = $region41
  $region40: #{actor_forward.1} parent=0 // pred_region
    _
  $region41: #{actor_forward.1} parent=0 // pred_fallthru
    _
  // Predicated region
  $region42: #{actor_forward.1} parent=0 // pred_check
    _
  $region43: #{actor_forward.1} parent=0 // pred_check_branch
    %37 = sbr.rel (0) target = $region45
  $region44: #{actor_forward.1} parent=0 // pred_region
    _
  $region45: #{actor_forward.1} parent=0 // pred_fallthru
    _
  %v38 = vld [vmem:[%s0] sm:$0xff]
  %v39 = vld [vmem:[%s1] sm:$0xff]
  %v40 = vld [vmem:[%s2] sm:$0x1]
  %v42 = vlaneseq
  %v43 = vshrl.u32 %v42, 7
  %v44 = vsub.s32 0, %v43
  %v45 = vrot.slane %v40, %v44
  %vm47 = vcmask 64512
  %v49 = vsel %vm47, %v38, 0
  %51 = vmatprep.subr.mxu0 0.0
  %52 = vmatpush1.msra.mxu0 %v39
  %53 = vmatprep.subr.mxu0 0.0
  %54 = vmatpush1.msra.mxu0 0.0
  %55 = vmatprep.subr.mxu0 0.0
  %56 = vmatpush1.msra.mxu0 0.0
  %57 = vmatprep.subr.mxu0 0.0
  %58 = vmatpush1.msra.mxu0 0.0
  %59 = vmatprep.subr.mxu0 0.0
  %60 = vmatpush1.msra.mxu0 0.0
  %61 = vmatprep.subr.mxu0 0.0
  %62 = vmatpush1.msra.mxu0 0.0
  %63 = vmatprep.subr.mxu0 0.0
  %64 = vmatpush1.msra.mxu0 0.0
  %65 = vmatprep.subr.mxu0 0.0
  %66 = vmatpush1.msra.mxu0 0.0
  %67 = vmatprep.subr.mxu0 0.0
  %68 = vmatpush1.msra.mxu0 0.0
  %69 = vmatprep.subr.mxu0 0.0
  %70 = vmatpush1.msra.mxu0 0.0
  %71 = vmatprep.subr.mxu0 0.0
  %72 = vmatpush1.msra.mxu0 0.0
  %73 = vmatprep.subr.mxu0 0.0
  %74 = vmatpush1.msra.mxu0 0.0
  %75 = vmatprep.subr.mxu0 0.0
  %76 = vmatpush1.msra.mxu0 0.0
  %77 = vmatprep.subr.mxu0 0.0
  %78 = vmatpush1.msra.mxu0 0.0
  %79 = vmatprep.subr.mxu0 0.0
  %80 = vmatpush1.msra.mxu0 0.0
  %81 = vmatprep.subr.mxu0 0.0
  %82 = vmatpush1.msra.mxu0 0.0
  %83 = vmatprep.subr.mxu0 0.0
  %84 = vmatpush1.msra.mxu0 0.0
  %85 = vmatprep.subr.mxu0 0.0
  %86 = vmatpush1.msra.mxu0 0.0
  %87 = vmatprep.subr.mxu0 0.0
  %88 = vmatpush1.msra.mxu0 0.0
  %89 = vmatprep.subr.mxu0 0.0
  %90 = vmatpush1.msra.mxu0 0.0
  %91 = vmatprep.subr.mxu0 0.0
  %92 = vmatpush1.msra.mxu0 0.0
  %93 = vmatprep.subr.mxu0 0.0
  %94 = vmatpush1.msra.mxu0 0.0
  %95 = vmatprep.subr.mxu0 0.0
  %96 = vmatpush1.msra.mxu0 0.0
  %97 = vmatprep.subr.mxu0 0.0
  %98 = vmatpush1.msra.mxu0 0.0
  %99 = vmatprep.subr.mxu0 0.0
  %100 = vmatpush1.msra.mxu0 0.0
  %101 = vmatprep.subr.mxu0 0.0
  %102 = vmatpush1.msra.mxu0 0.0
  %103 = vmatprep.subr.mxu0 0.0
  %104 = vmatpush1.msra.mxu0 0.0
  %105 = vmatprep.subr.mxu0 0.0
  %106 = vmatpush1.msra.mxu0 0.0
  %107 = vmatprep.subr.mxu0 0.0
  %108 = vmatpush1.msra.mxu0 0.0
  %109 = vmatprep.subr.mxu0 0.0
  %110 = vmatpush1.msra.mxu0 0.0
  %111 = vmatprep.subr.mxu0 0.0
  %112 = vmatpush1.msra.mxu0 0.0
  %113 = vmatprep.subr.mxu0 0.0
  %114 = vmatpush1.msra.mxu0 0.0
  %115 = vmatprep.mubr.f32.mxu0 0.0
  %116 = vmatmul.mubr.f32.gmra.mrb[0].mxu0 %v49
  %v117 = vpop.f32.mrb[0].mxu0
  %v118 = vadd.f32 %v45, %v117
  %v119 = vpop.f32.mrb[0].mxu0
  %120 = vdwg.mxu0
  %v121 = vld [vmem:[%s3] sm:$0x1]
  %v122 = vld [vmem:[%s4] sm:$0x1]
  %vm123 = vcmask 523264
  %v124 = vsel %vm123, %v118, 0.0
  %125 = vadd.xlane.f32.xlu0 %v124
  %v126 = vpop.xlane.xlu0 %125
  %v127 = vmul.f32 %v126, 0.015625
  %v128 = vsub.f32 %v118, %v127
  %v129 = vmul.f32 %v128, %v128
  %v130 = vsel %vm123, %v129, 0.0
  %131 = vadd.xlane.f32.xlu0 %v130
  %v132 = vpop.xlane.xlu0 %131
  %v133 = vmul.f32 %v132, 0.015625
  %v134 = vadd.f32 %v133, 1e-05
  %v135 = vrsqrt.pop %v134
  %v136 = vmul.f32 %v128, %v135
  %v138 = vlaneseq
  %v139 = vshrl.u32 %v138, 7
  %v140 = vsub.s32 0, %v139
  %v141 = vrot.slane %v121, %v140
  %v143 = vmul.f32 %v136, %v141
  %v145 = vlaneseq
  %v146 = vshrl.u32 %v145, 7
  %v147 = vsub.s32 0, %v146
  %v148 = vrot.slane %v122, %v147
  %v150 = vadd.f32 %v143, %v148
  %v151 = vmax.f32 %v150, 0.0
  %v152 = vld [vmem:[%s5] sm:$0xff]
  %v153 = vld [vmem:[%s5 + $0x8] sm:$0xff]
  %v154 = vld [vmem:[%s5 + $0x10] sm:$0xff]
  %v155 = vld [vmem:[%s5 + $0x18] sm:$0xff]
  %v156 = vld [vmem:[%s5 + $0x20] sm:$0xff]
  %v157 = vld [vmem:[%s5 + $0x28] sm:$0xff]
  %v158 = vld [vmem:[%s5 + $0x30] sm:$0xff]
  %v159 = vld [vmem:[%s5 + $0x38] sm:$0xff]
  %v160 = vld [vmem:[%s6] sm:$0x1]
  %v162 = vlaneseq
  %v163 = vshrl.u32 %v162, 7
  %v164 = vsub.s32 0, %v163
  %v165 = vrot.slane %v160, %v164
  %v168 = vsel %vm123, %v151, 0
  %170 = vmatprep.subr.mxu0 0.0
  %171 = vmatpush1.msra.mxu0 %v152
  %172 = vmatprep.subr.mxu0 0.0
  %173 = vmatpush1.msra.mxu0 %v153
  %174 = vmatprep.subr.mxu0 0.0
  %175 = vmatpush1.msra.mxu0 %v154
  %176 = vmatprep.subr.mxu0 0.0
  %177 = vmatpush1.msra.mxu0 %v155
  %178 = vmatprep.subr.mxu0 0.0
  %179 = vmatpush1.msra.mxu0 %v156
  %180 = vmatprep.subr.mxu0 0.0
  %181 = vmatpush1.msra.mxu0 %v157
  %182 = vmatprep.subr.mxu0 0.0
  %183 = vmatpush1.msra.mxu0 %v158
  %184 = vmatprep.subr.mxu0 0.0
  %185 = vmatpush1.msra.mxu0 %v159
  %186 = vmatprep.subr.mxu0 0.0
  %187 = vmatpush1.msra.mxu0 0.0
  %188 = vmatprep.subr.mxu0 0.0
  %189 = vmatpush1.msra.mxu0 0.0
  %190 = vmatprep.subr.mxu0 0.0
  %191 = vmatpush1.msra.mxu0 0.0
  %192 = vmatprep.subr.mxu0 0.0
  %193 = vmatpush1.msra.mxu0 0.0
  %194 = vmatprep.subr.mxu0 0.0
  %195 = vmatpush1.msra.mxu0 0.0
  %196 = vmatprep.subr.mxu0 0.0
  %197 = vmatpush1.msra.mxu0 0.0
  %198 = vmatprep.subr.mxu0 0.0
  %199 = vmatpush1.msra.mxu0 0.0
  %200 = vmatprep.subr.mxu0 0.0
  %201 = vmatpush1.msra.mxu0 0.0
  %202 = vmatprep.subr.mxu0 0.0
  %203 = vmatpush1.msra.mxu0 0.0
  %204 = vmatprep.subr.mxu0 0.0
  %205 = vmatpush1.msra.mxu0 0.0
  %206 = vmatprep.subr.mxu0 0.0
  %207 = vmatpush1.msra.mxu0 0.0
  %208 = vmatprep.subr.mxu0 0.0
  %209 = vmatpush1.msra.mxu0 0.0
  %210 = vmatprep.subr.mxu0 0.0
  %211 = vmatpush1.msra.mxu0 0.0
  %212 = vmatprep.subr.mxu0 0.0
  %213 = vmatpush1.msra.mxu0 0.0
  %214 = vmatprep.subr.mxu0 0.0
  %215 = vmatpush1.msra.mxu0 0.0
  %216 = vmatprep.subr.mxu0 0.0
  %217 = vmatpush1.msra.mxu0 0.0
  %218 = vmatprep.subr.mxu0 0.0
  %219 = vmatpush1.msra.mxu0 0.0
  %220 = vmatprep.subr.mxu0 0.0
  %221 = vmatpush1.msra.mxu0 0.0
  %222 = vmatprep.subr.mxu0 0.0
  %223 = vmatpush1.msra.mxu0 0.0
  %224 = vmatprep.subr.mxu0 0.0
  %225 = vmatpush1.msra.mxu0 0.0
  %226 = vmatprep.subr.mxu0 0.0
  %227 = vmatpush1.msra.mxu0 0.0
  %228 = vmatprep.subr.mxu0 0.0
  %229 = vmatpush1.msra.mxu0 0.0
  %230 = vmatprep.subr.mxu0 0.0
  %231 = vmatpush1.msra.mxu0 0.0
  %232 = vmatprep.subr.mxu0 0.0
  %233 = vmatpush1.msra.mxu0 0.0
  %234 = vmatprep.mubr.f32.mxu0 0.0
  %235 = vmatmul.mubr.f32.gmra.mrb[0].mxu0 %v168
  %v236 = vpop.f32.mrb[0].mxu0
  %v237 = vadd.f32 %v165, %v236
  %v238 = vpop.f32.mrb[0].mxu0
  %239 = vdwg.mxu0
  %v240 = vld [vmem:[%s7] sm:$0x1]
  %v241 = vld [vmem:[%s8] sm:$0x1]
  %vm242 = vcmask 261120
  %v243 = vsel %vm242, %v237, 0.0
  %244 = vadd.xlane.f32.xlu0 %v243
  %v245 = vpop.xlane.xlu0 %244
  %v246 = vmul.f32 %v245, 0.03125
  %v247 = vsub.f32 %v237, %v246
  %v248 = vmul.f32 %v247, %v247
  %v249 = vsel %vm242, %v248, 0.0
  %250 = vadd.xlane.f32.xlu0 %v249
  %v251 = vpop.xlane.xlu0 %250
  %v252 = vmul.f32 %v251, 0.03125
  %v253 = vadd.f32 %v252, 1e-05
  %v254 = vrsqrt.pop %v253
  %v255 = vmul.f32 %v247, %v254
  %v257 = vlaneseq
  %v258 = vshrl.u32 %v257, 7
  %v259 = vsub.s32 0, %v258
  %v260 = vrot.slane %v240, %v259
  %v262 = vmul.f32 %v255, %v260
  %v264 = vlaneseq
  %v265 = vshrl.u32 %v264, 7
  %v266 = vsub.s32 0, %v265
  %v267 = vrot.slane %v241, %v266
  %v269 = vadd.f32 %v262, %v267
  %v270 = vmax.f32 %v269, 0.0
  %v271 = vld [vmem:[%s9] sm:$0xff]
  %v272 = vld [vmem:[%s9 + $0x8] sm:$0xff]
  %v273 = vld [vmem:[%s9 + $0x10] sm:$0xff]
  %v274 = vld [vmem:[%s9 + $0x18] sm:$0xff]
  %v275 = vld [vmem:[%s10] sm:$0x1]
  %v277 = vlaneseq
  %v278 = vshrl.u32 %v277, 7
  %v279 = vsub.s32 0, %v278
  %v280 = vrot.slane %v275, %v279
  %v283 = vsel %vm242, %v270, 0
  %285 = vmatprep.subr.mxu0 0.0
  %286 = vmatpush1.msra.mxu0 %v271
  %287 = vmatprep.subr.mxu0 0.0
  %288 = vmatpush1.msra.mxu0 %v272
  %289 = vmatprep.subr.mxu0 0.0
  %290 = vmatpush1.msra.mxu0 %v273
  %291 = vmatprep.subr.mxu0 0.0
  %292 = vmatpush1.msra.mxu0 %v274
  %293 = vmatprep.subr.mxu0 0.0
  %294 = vmatpush1.msra.mxu0 0.0
  %295 = vmatprep.subr.mxu0 0.0
  %296 = vmatpush1.msra.mxu0 0.0
  %297 = vmatprep.subr.mxu0 0.0
  %298 = vmatpush1.msra.mxu0 0.0
  %299 = vmatprep.subr.mxu0 0.0
  %300 = vmatpush1.msra.mxu0 0.0
  %301 = vmatprep.subr.mxu0 0.0
  %302 = vmatpush1.msra.mxu0 0.0
  %303 = vmatprep.subr.mxu0 0.0
  %304 = vmatpush1.msra.mxu0 0.0
  %305 = vmatprep.subr.mxu0 0.0
  %306 = vmatpush1.msra.mxu0 0.0
  %307 = vmatprep.subr.mxu0 0.0
  %308 = vmatpush1.msra.mxu0 0.0
  %309 = vmatprep.subr.mxu0 0.0
  %310 = vmatpush1.msra.mxu0 0.0
  %311 = vmatprep.subr.mxu0 0.0
  %312 = vmatpush1.msra.mxu0 0.0
  %313 = vmatprep.subr.mxu0 0.0
  %314 = vmatpush1.msra.mxu0 0.0
  %315 = vmatprep.subr.mxu0 0.0
  %316 = vmatpush1.msra.mxu0 0.0
  %317 = vmatprep.subr.mxu0 0.0
  %318 = vmatpush1.msra.mxu0 0.0
  %319 = vmatprep.subr.mxu0 0.0
  %320 = vmatpush1.msra.mxu0 0.0
  %321 = vmatprep.subr.mxu0 0.0
  %322 = vmatpush1.msra.mxu0 0.0
  %323 = vmatprep.subr.mxu0 0.0
  %324 = vmatpush1.msra.mxu0 0.0
  %325 = vmatprep.subr.mxu0 0.0
  %326 = vmatpush1.msra.mxu0 0.0
  %327 = vmatprep.subr.mxu0 0.0
  %328 = vmatpush1.msra.mxu0 0.0
  %329 = vmatprep.subr.mxu0 0.0
  %330 = vmatpush1.msra.mxu0 0.0
  %331 = vmatprep.subr.mxu0 0.0
  %332 = vmatpush1.msra.mxu0 0.0
  %333 = vmatprep.subr.mxu0 0.0
  %334 = vmatpush1.msra.mxu0 0.0
  %335 = vmatprep.subr.mxu0 0.0
  %336 = vmatpush1.msra.mxu0 0.0
  %337 = vmatprep.subr.mxu0 0.0
  %338 = vmatpush1.msra.mxu0 0.0
  %339 = vmatprep.subr.mxu0 0.0
  %340 = vmatpush1.msra.mxu0 0.0
  %341 = vmatprep.subr.mxu0 0.0
  %342 = vmatpush1.msra.mxu0 0.0
  %343 = vmatprep.subr.mxu0 0.0
  %344 = vmatpush1.msra.mxu0 0.0
  %345 = vmatprep.subr.mxu0 0.0
  %346 = vmatpush1.msra.mxu0 0.0
  %347 = vmatprep.subr.mxu0 0.0
  %348 = vmatpush1.msra.mxu0 0.0
  %349 = vmatprep.mubr.f32.mxu0 0.0
  %350 = vmatmul.mubr.f32.gmra.mrb[0].mxu0 %v283
  %v351 = vpop.f32.mrb[0].mxu0
  %v352 = vadd.f32 %v280, %v351
  %v353 = vpop.f32.mrb[0].mxu0
  %354 = vdwg.mxu0
  %v355 = vtanh.pop %v352
  %356 = vst [vmem:[%s11] sm:$0xff] %v355
  // Predicated region
  $region46: #{actor_forward.1} parent=0 // pred_check
    _
  $region47: #{actor_forward.1} parent=0 // pred_check_branch
    %358 = sbr.rel (0) target = $region49
  $region48: #{actor_forward.1} parent=0 // pred_region
    _
  $region49: #{actor_forward.1} parent=0 // pred_fallthru
    _
  // Predicated region
  $region50: #{actor_forward.1} parent=0 // pred_check
    _
  $region51: #{actor_forward.1} parent=0 // pred_check_branch
    %360 = sbr.rel (0) target = $region53
  $region52: #{actor_forward.1} parent=0 // pred_region
    _
  $region53: #{actor_forward.1} parent=0 // pred_fallthru
    _

</llo_original>
